<compile_context>
chip_gen: v6e
topology: v6e:2x2x1
jax: 0.10.0
libtpu: 0.0.40
codegen_flags: <defaults>
</compile_context>

<pallas_src>
import jax
import jax.numpy as jnp
from jax.experimental import pallas as pl
from jax.experimental.pallas import tpu as pltpu

# ---- model dims (small, consistent with the module) ----
VOCAB = 50
EMBED_DIM = 16
HIDDEN_DIM = 32          # 4H = 128, 8H = 256 (two f32 vregs wide)
CLASSES = 5
BATCH = 8
SEQ = 8
NUM_LAYERS = 2           # hard-wired to 2 below (matches num_layers=2 default)


def _lstm_kernel(add_ref,    # (T, B, 8H) per-step additive: layer-0 slots hold
                             #   x0[t] = emb@W_ih0+b0, layer-1 slots hold b1
                 wblk_ref,   # (2H, 8H) block weight: rows 0..H-1 from h0(t)
                             #   [W_hh0 | W_ih1], rows H..2H-1 from h1(t-1) [0 | W_hh1]
                 wfc_ref,    # (H, C)
                 bfc_ref,    # (1, C)
                 out_ref):   # (B, C)
    T, B, H8 = add_ref.shape
    H = H8 // 8
    H2 = 2 * H

    wblk = wblk_ref[...]     # hoisted weight load (used by every unrolled step)

    # ---- peeled prologue: layer-0 cell at t=0 with h = c = 0 (no matmul) ----
    a0 = add_ref[0]                       # (B, 8H); layer-0 slots = x0[0]
    sig0 = jax.nn.sigmoid(a0)
    tnh0 = jnp.tanh(a0)
    i0 = sig0[:, 0:H]                     # i, layer-0 slot
    g0 = tnh0[:, 4 * H:5 * H]             # g, layer-0 slot
    o0 = sig0[:, 6 * H:7 * H]             # o, layer-0 slot
    c00 = i0 * g0                         # f * c_prev == 0
    h00 = o0 * jnp.tanh(c00)
    z = jnp.zeros_like(h00)
    hc = jnp.concatenate([h00, z], axis=1)   # [h0(0) | h1(-1)=0]  (B, 2H)
    cc = jnp.concatenate([c00, z], axis=1)   # [c0(0) | c1(-1)=0]  (B, 2H)

    # ---- main recurrence (static unroll, T compile-time constant) ----
    # One fused matmul per step.  fused columns (gate-interleaved):
    #   [i0 i1 | f0 f1 | g0 g1 | o0 o1]; the layer-0 half is the cell at t+1,
    # the layer-1 half is the cell at t.  Both halves update in the same phase.
    for t in range(T):
        s = t + 1 if t + 1 < T else T - 1    # last iter: layer-0 half is unused garbage
        fused = jnp.dot(hc, wblk, preferred_element_type=jnp.float32) + add_ref[s]
        # Full-width activations (two EUP pushes over the whole (B,8H) gates).
        sig = jax.nn.sigmoid(fused)
        tnh = jnp.tanh(fused)
        i_pk = sig[:, 0:H2]
        f_pk = sig[:, H2:2 * H2]
        g_pk = tnh[:, 2 * H2:3 * H2]
        o_pk = sig[:, 3 * H2:4 * H2]
        cc = f_pk * cc + i_pk * g_pk         # [c0(t+1) | c1(t)]
        hc = o_pk * jnp.tanh(cc)             # [h0(t+1) | h1(t)]  (single tanh push)

    h1_last = hc[:, H:H2]                    # top-layer hidden at the last timestep

    # dropout(0.3) is identity in eval mode; fc head.
    logits = (jnp.dot(h1_last, wfc_ref[...],
                      preferred_element_type=jnp.float32)
              + bfc_ref[...])                # (B, C)

    # F.softmax(out, dim=0): softmax over the BATCH axis (axis 0), per class.
    m = jnp.max(logits, axis=0, keepdims=True)
    e = jnp.exp(logits - m)
    denom = jnp.sum(e, axis=0, keepdims=True)
    out_ref[...] = e * pl.reciprocal(denom, approx=False)


def prepare_inference_params(params):
    """One-time parameter-only prep (cache the result across forward calls)."""
    H = HIDDEN_DIM
    # Fold layer-0 input projection + bias into the embedding table (V, 4H).
    proj = params["embedding"] @ params["w_ih0"] + params["b0"]          # (V, 4H)
    proj_g = proj.reshape(VOCAB, 4, H)                                   # gates i,f,g,o
    b1_g = jnp.broadcast_to(params["b1"].reshape(1, 4, H), (VOCAB, 4, H))
    # Gate-interleave: per gate [layer-0 value | layer-1 bias] -> (V, 8H).
    table = jnp.stack([proj_g, b1_g], axis=2).reshape(VOCAB, 8 * H)

    # Block weight (2H, 8H): rows from h0(t) = [W_hh0 | W_ih1] per gate,
    # rows from h1(t-1) = [0 | W_hh1] per gate (same gate-interleaved columns).
    whh0_g = params["w_hh0"].reshape(H, 4, H)
    wih1_g = params["w_ih1"].reshape(H, 4, H)
    whh1_g = params["w_hh1"].reshape(H, 4, H)
    zeros = jnp.zeros_like(whh0_g)
    top = jnp.stack([whh0_g, wih1_g], axis=2).reshape(H, 8 * H)
    bot = jnp.stack([zeros, whh1_g], axis=2).reshape(H, 8 * H)
    wblk = jnp.concatenate([top, bot], axis=0)                           # (2H, 8H)

    return {"table": table, "wblk": wblk,
            "w_fc": params["w_fc"], "b_fc": params["b_fc"]}


def lstm_base_forward(tokens, prep):
    """tokens: (B, T) int32; prep: prepare_inference_params output.
    Returns (B, C) f32 softmax-over-batch probabilities."""
    B = tokens.shape[0]
    # Single per-call glue op: time-major gather of the pre-interleaved table.
    add_tb = prep["table"][tokens.T]                  # (T, B, 8H)

    vmem = pl.BlockSpec(memory_space=pltpu.MemorySpace.VMEM)
    return pl.pallas_call(
        _lstm_kernel,
        out_shape=jax.ShapeDtypeStruct((B, CLASSES), jnp.float32),
        in_specs=[vmem] * 4,
        out_specs=vmem,
    )(add_tb, prep["wblk"], prep["w_fc"], prep["b_fc"])


def _reference(tokens, params):
    """Pure-JAX reference mirroring torch nn.LSTM (eval mode) + fc + softmax(dim=0)."""
    emb = params["embedding"][tokens]            # (B, T, E)
    B = tokens.shape[0]
    H = HIDDEN_DIM
    h0 = c0 = h1 = c1 = jnp.zeros((B, H), jnp.float32)

    def cell(x, h, c, wih, whh, b):
        g = x @ wih + h @ whh + b
        i = jax.nn.sigmoid(g[:, 0 * H:1 * H])
        f = jax.nn.sigmoid(g[:, 1 * H:2 * H])
        gg = jnp.tanh(g[:, 2 * H:3 * H])
        o = jax.nn.sigmoid(g[:, 3 * H:4 * H])
        c = f * c + i * gg
        h = o * jnp.tanh(c)
        return h, c

    for t in range(SEQ):
        x = emb[:, t, :]
        h0, c0 = cell(x, h0, c0, params["w_ih0"], params["w_hh0"], params["b0"])
        h1, c1 = cell(h0, h1, c1, params["w_ih1"], params["w_hh1"], params["b1"])

    logits = h1 @ params["w_fc"] + params["b_fc"]
    return jax.nn.softmax(logits, axis=0)


def init_params(key):
    ks = jax.random.split(key, 10)
    scale = 0.1
    H4 = 4 * HIDDEN_DIM
    return {
        "embedding": jax.random.normal(ks[0], (VOCAB, EMBED_DIM), jnp.float32) * scale,
        # layer 0: input EMBED_DIM -> hidden, weights stored transposed (in, 4H)
        "w_ih0": jax.random.normal(ks[1], (EMBED_DIM, H4), jnp.float32) * scale,
        "w_hh0": jax.random.normal(ks[2], (HIDDEN_DIM, H4), jnp.float32) * scale,
        "b0": jax.random.normal(ks[3], (1, H4), jnp.float32) * scale,   # b_ih + b_hh fused
        # layer 1: input HIDDEN_DIM -> hidden
        "w_ih1": jax.random.normal(ks[4], (HIDDEN_DIM, H4), jnp.float32) * scale,
        "w_hh1": jax.random.normal(ks[5], (HIDDEN_DIM, H4), jnp.float32) * scale,
        "b1": jax.random.normal(ks[6], (1, H4), jnp.float32) * scale,
        # fc: hidden -> classes
        "w_fc": jax.random.normal(ks[7], (HIDDEN_DIM, CLASSES), jnp.float32) * scale,
        "b_fc": jax.random.normal(ks[8], (1, CLASSES), jnp.float32) * scale,
    }


if __name__ == "__main__":
    key = jax.random.PRNGKey(0)
    k_par, k_tok = jax.random.split(key)
    params = init_params(k_par)
    prep = prepare_inference_params(params)      # one-time, cached across calls
    tokens = jax.random.randint(k_tok, (BATCH, SEQ), 0, VOCAB, dtype=jnp.int32)

    out = jax.block_until_ready(lstm_base_forward(tokens, prep))
    ref = jax.block_until_ready(_reference(tokens, params))

    assert out.shape == (BATCH, CLASSES), out.shape
    assert jnp.allclose(out, ref, atol=1e-5, rtol=1e-5), (
        f"max abs diff {jnp.max(jnp.abs(out - ref))}")
    print("KERNEL_OK")
</pallas_src>

<mosaic_0001>
module attributes {stable_mosaic.version = 11 : i64} {
  func.func @_lstm_kernel(%arg0: memref<8x8x256xf32, #tpu.memory_space<vmem>>, %arg1: memref<64x256xf32, #tpu.memory_space<vmem>>, %arg2: memref<32x5xf32, #tpu.memory_space<vmem>>, %arg3: memref<1x5xf32, #tpu.memory_space<vmem>>, %arg4: memref<8x5xf32, #tpu.memory_space<vmem>>) attributes {dimension_semantics = [], scalar_prefetch = 0 : i64, scratch_operands = 0 : i64, tpu.core_type = #tpu.core_type<tc>} {
    %c0 = arith.constant 0 : index
    %c0_0 = arith.constant 0 : index
    %0 = vector.load %arg1[%c0, %c0_0] : memref<64x256xf32, #tpu.memory_space<vmem>>, vector<64x256xf32>
    %c0_1 = arith.constant 0 : index
    %c0_2 = arith.constant 0 : index
    %c0_3 = arith.constant 0 : index
    %1 = vector.load %arg0[%c0_1, %c0_2, %c0_3] : memref<8x8x256xf32, #tpu.memory_space<vmem>>, vector<1x8x256xf32>
    %2 = vector.shape_cast %1 : vector<1x8x256xf32> to vector<8x256xf32>
    %3 = arith.negf %2 : vector<8x256xf32>
    %4 = math.exp %3 : vector<8x256xf32>
    %cst = arith.constant 1.000000e+00 : f32
    %5 = vector.broadcast %cst : f32 to vector<8x256xf32>
    %6 = arith.addf %5, %4 : vector<8x256xf32>
    %7 = arith.divf %5, %6 : vector<8x256xf32>
    %8 = math.tanh %2 : vector<8x256xf32>
    %9 = vector.extract_strided_slice %7 {offsets = [0, 0], sizes = [8, 32], strides = [1, 1]} : vector<8x256xf32> to vector<8x32xf32>
    %10 = vector.extract_strided_slice %8 {offsets = [0, 128], sizes = [8, 32], strides = [1, 1]} : vector<8x256xf32> to vector<8x32xf32>
    %11 = vector.extract_strided_slice %7 {offsets = [0, 192], sizes = [8, 32], strides = [1, 1]} : vector<8x256xf32> to vector<8x32xf32>
    %12 = arith.mulf %9, %10 : vector<8x32xf32>
    %13 = math.tanh %12 : vector<8x32xf32>
    %14 = arith.mulf %11, %13 : vector<8x32xf32>
    %cst_4 = arith.constant 0.000000e+00 : f32
    %15 = vector.broadcast %cst_4 : f32 to vector<8x32xf32>
    %16 = tpu.concatenate %14, %15 in 1 : vector<8x32xf32>, vector<8x32xf32> -> vector<8x64xf32>
    %17 = tpu.concatenate %12, %15 in 1 : vector<8x32xf32>, vector<8x32xf32> -> vector<8x64xf32>
    %cst_5 = arith.constant dense<0.000000e+00> : vector<8x256xf32>
    %18 = tpu.matmul %16, %0, %cst_5 {dimension_numbers = #tpu.dot_dimension_numbers<[1], [0], [0], [1], [0, 0, 1, 1], [], []>} : vector<8x64xf32>, vector<64x256xf32>, vector<8x256xf32> -> vector<8x256xf32>
    %c1 = arith.constant 1 : index
    %c0_6 = arith.constant 0 : index
    %c0_7 = arith.constant 0 : index
    %19 = vector.load %arg0[%c1, %c0_6, %c0_7] : memref<8x8x256xf32, #tpu.memory_space<vmem>>, vector<1x8x256xf32>
    %20 = vector.shape_cast %19 : vector<1x8x256xf32> to vector<8x256xf32>
    %21 = arith.addf %18, %20 : vector<8x256xf32>
    %22 = arith.negf %21 : vector<8x256xf32>
    %23 = math.exp %22 : vector<8x256xf32>
    %cst_8 = arith.constant 1.000000e+00 : f32
    %24 = vector.broadcast %cst_8 : f32 to vector<8x256xf32>
    %25 = arith.addf %24, %23 : vector<8x256xf32>
    %26 = arith.divf %24, %25 : vector<8x256xf32>
    %27 = math.tanh %21 : vector<8x256xf32>
    %28 = vector.extract_strided_slice %26 {offsets = [0, 0], sizes = [8, 64], strides = [1, 1]} : vector<8x256xf32> to vector<8x64xf32>
    %29 = vector.extract_strided_slice %26 {offsets = [0, 64], sizes = [8, 64], strides = [1, 1]} : vector<8x256xf32> to vector<8x64xf32>
    %30 = vector.extract_strided_slice %27 {offsets = [0, 128], sizes = [8, 64], strides = [1, 1]} : vector<8x256xf32> to vector<8x64xf32>
    %31 = vector.extract_strided_slice %26 {offsets = [0, 192], sizes = [8, 64], strides = [1, 1]} : vector<8x256xf32> to vector<8x64xf32>
    %32 = arith.mulf %29, %17 : vector<8x64xf32>
    %33 = arith.mulf %28, %30 : vector<8x64xf32>
    %34 = arith.addf %32, %33 : vector<8x64xf32>
    %35 = math.tanh %34 : vector<8x64xf32>
    %36 = arith.mulf %31, %35 : vector<8x64xf32>
    %cst_9 = arith.constant dense<0.000000e+00> : vector<8x256xf32>
    %37 = tpu.matmul %36, %0, %cst_9 {dimension_numbers = #tpu.dot_dimension_numbers<[1], [0], [0], [1], [0, 0, 1, 1], [], []>} : vector<8x64xf32>, vector<64x256xf32>, vector<8x256xf32> -> vector<8x256xf32>
    %c2 = arith.constant 2 : index
    %c0_10 = arith.constant 0 : index
    %c0_11 = arith.constant 0 : index
    %38 = vector.load %arg0[%c2, %c0_10, %c0_11] : memref<8x8x256xf32, #tpu.memory_space<vmem>>, vector<1x8x256xf32>
    %39 = vector.shape_cast %38 : vector<1x8x256xf32> to vector<8x256xf32>
    %40 = arith.addf %37, %39 : vector<8x256xf32>
    %41 = arith.negf %40 : vector<8x256xf32>
    %42 = math.exp %41 : vector<8x256xf32>
    %cst_12 = arith.constant 1.000000e+00 : f32
    %43 = vector.broadcast %cst_12 : f32 to vector<8x256xf32>
    %44 = arith.addf %43, %42 : vector<8x256xf32>
    %45 = arith.divf %43, %44 : vector<8x256xf32>
    %46 = math.tanh %40 : vector<8x256xf32>
    %47 = vector.extract_strided_slice %45 {offsets = [0, 0], sizes = [8, 64], strides = [1, 1]} : vector<8x256xf32> to vector<8x64xf32>
    %48 = vector.extract_strided_slice %45 {offsets = [0, 64], sizes = [8, 64], strides = [1, 1]} : vector<8x256xf32> to vector<8x64xf32>
    %49 = vector.extract_strided_slice %46 {offsets = [0, 128], sizes = [8, 64], strides = [1, 1]} : vector<8x256xf32> to vector<8x64xf32>
    %50 = vector.extract_strided_slice %45 {offsets = [0, 192], sizes = [8, 64], strides = [1, 1]} : vector<8x256xf32> to vector<8x64xf32>
    %51 = arith.mulf %48, %34 : vector<8x64xf32>
    %52 = arith.mulf %47, %49 : vector<8x64xf32>
    %53 = arith.addf %51, %52 : vector<8x64xf32>
    %54 = math.tanh %53 : vector<8x64xf32>
    %55 = arith.mulf %50, %54 : vector<8x64xf32>
    %cst_13 = arith.constant dense<0.000000e+00> : vector<8x256xf32>
    %56 = tpu.matmul %55, %0, %cst_13 {dimension_numbers = #tpu.dot_dimension_numbers<[1], [0], [0], [1], [0, 0, 1, 1], [], []>} : vector<8x64xf32>, vector<64x256xf32>, vector<8x256xf32> -> vector<8x256xf32>
    %c3 = arith.constant 3 : index
    %c0_14 = arith.constant 0 : index
    %c0_15 = arith.constant 0 : index
    %57 = vector.load %arg0[%c3, %c0_14, %c0_15] : memref<8x8x256xf32, #tpu.memory_space<vmem>>, vector<1x8x256xf32>
    %58 = vector.shape_cast %57 : vector<1x8x256xf32> to vector<8x256xf32>
    %59 = arith.addf %56, %58 : vector<8x256xf32>
    %60 = arith.negf %59 : vector<8x256xf32>
    %61 = math.exp %60 : vector<8x256xf32>
    %cst_16 = arith.constant 1.000000e+00 : f32
    %62 = vector.broadcast %cst_16 : f32 to vector<8x256xf32>
    %63 = arith.addf %62, %61 : vector<8x256xf32>
    %64 = arith.divf %62, %63 : vector<8x256xf32>
    %65 = math.tanh %59 : vector<8x256xf32>
    %66 = vector.extract_strided_slice %64 {offsets = [0, 0], sizes = [8, 64], strides = [1, 1]} : vector<8x256xf32> to vector<8x64xf32>
    %67 = vector.extract_strided_slice %64 {offsets = [0, 64], sizes = [8, 64], strides = [1, 1]} : vector<8x256xf32> to vector<8x64xf32>
    %68 = vector.extract_strided_slice %65 {offsets = [0, 128], sizes = [8, 64], strides = [1, 1]} : vector<8x256xf32> to vector<8x64xf32>
    %69 = vector.extract_strided_slice %64 {offsets = [0, 192], sizes = [8, 64], strides = [1, 1]} : vector<8x256xf32> to vector<8x64xf32>
    %70 = arith.mulf %67, %53 : vector<8x64xf32>
    %71 = arith.mulf %66, %68 : vector<8x64xf32>
    %72 = arith.addf %70, %71 : vector<8x64xf32>
    %73 = math.tanh %72 : vector<8x64xf32>
    %74 = arith.mulf %69, %73 : vector<8x64xf32>
    %cst_17 = arith.constant dense<0.000000e+00> : vector<8x256xf32>
    %75 = tpu.matmul %74, %0, %cst_17 {dimension_numbers = #tpu.dot_dimension_numbers<[1], [0], [0], [1], [0, 0, 1, 1], [], []>} : vector<8x64xf32>, vector<64x256xf32>, vector<8x256xf32> -> vector<8x256xf32>
    %c4 = arith.constant 4 : index
    %c0_18 = arith.constant 0 : index
    %c0_19 = arith.constant 0 : index
    %76 = vector.load %arg0[%c4, %c0_18, %c0_19] : memref<8x8x256xf32, #tpu.memory_space<vmem>>, vector<1x8x256xf32>
    %77 = vector.shape_cast %76 : vector<1x8x256xf32> to vector<8x256xf32>
    %78 = arith.addf %75, %77 : vector<8x256xf32>
    %79 = arith.negf %78 : vector<8x256xf32>
    %80 = math.exp %79 : vector<8x256xf32>
    %cst_20 = arith.constant 1.000000e+00 : f32
    %81 = vector.broadcast %cst_20 : f32 to vector<8x256xf32>
    %82 = arith.addf %81, %80 : vector<8x256xf32>
    %83 = arith.divf %81, %82 : vector<8x256xf32>
    %84 = math.tanh %78 : vector<8x256xf32>
    %85 = vector.extract_strided_slice %83 {offsets = [0, 0], sizes = [8, 64], strides = [1, 1]} : vector<8x256xf32> to vector<8x64xf32>
    %86 = vector.extract_strided_slice %83 {offsets = [0, 64], sizes = [8, 64], strides = [1, 1]} : vector<8x256xf32> to vector<8x64xf32>
    %87 = vector.extract_strided_slice %84 {offsets = [0, 128], sizes = [8, 64], strides = [1, 1]} : vector<8x256xf32> to vector<8x64xf32>
    %88 = vector.extract_strided_slice %83 {offsets = [0, 192], sizes = [8, 64], strides = [1, 1]} : vector<8x256xf32> to vector<8x64xf32>
    %89 = arith.mulf %86, %72 : vector<8x64xf32>
    %90 = arith.mulf %85, %87 : vector<8x64xf32>
    %91 = arith.addf %89, %90 : vector<8x64xf32>
    %92 = math.tanh %91 : vector<8x64xf32>
    %93 = arith.mulf %88, %92 : vector<8x64xf32>
    %cst_21 = arith.constant dense<0.000000e+00> : vector<8x256xf32>
    %94 = tpu.matmul %93, %0, %cst_21 {dimension_numbers = #tpu.dot_dimension_numbers<[1], [0], [0], [1], [0, 0, 1, 1], [], []>} : vector<8x64xf32>, vector<64x256xf32>, vector<8x256xf32> -> vector<8x256xf32>
    %c5 = arith.constant 5 : index
    %c0_22 = arith.constant 0 : index
    %c0_23 = arith.constant 0 : index
    %95 = vector.load %arg0[%c5, %c0_22, %c0_23] : memref<8x8x256xf32, #tpu.memory_space<vmem>>, vector<1x8x256xf32>
    %96 = vector.shape_cast %95 : vector<1x8x256xf32> to vector<8x256xf32>
    %97 = arith.addf %94, %96 : vector<8x256xf32>
    %98 = arith.negf %97 : vector<8x256xf32>
    %99 = math.exp %98 : vector<8x256xf32>
    %cst_24 = arith.constant 1.000000e+00 : f32
    %100 = vector.broadcast %cst_24 : f32 to vector<8x256xf32>
    %101 = arith.addf %100, %99 : vector<8x256xf32>
    %102 = arith.divf %100, %101 : vector<8x256xf32>
    %103 = math.tanh %97 : vector<8x256xf32>
    %104 = vector.extract_strided_slice %102 {offsets = [0, 0], sizes = [8, 64], strides = [1, 1]} : vector<8x256xf32> to vector<8x64xf32>
    %105 = vector.extract_strided_slice %102 {offsets = [0, 64], sizes = [8, 64], strides = [1, 1]} : vector<8x256xf32> to vector<8x64xf32>
    %106 = vector.extract_strided_slice %103 {offsets = [0, 128], sizes = [8, 64], strides = [1, 1]} : vector<8x256xf32> to vector<8x64xf32>
    %107 = vector.extract_strided_slice %102 {offsets = [0, 192], sizes = [8, 64], strides = [1, 1]} : vector<8x256xf32> to vector<8x64xf32>
    %108 = arith.mulf %105, %91 : vector<8x64xf32>
    %109 = arith.mulf %104, %106 : vector<8x64xf32>
    %110 = arith.addf %108, %109 : vector<8x64xf32>
    %111 = math.tanh %110 : vector<8x64xf32>
    %112 = arith.mulf %107, %111 : vector<8x64xf32>
    %cst_25 = arith.constant dense<0.000000e+00> : vector<8x256xf32>
    %113 = tpu.matmul %112, %0, %cst_25 {dimension_numbers = #tpu.dot_dimension_numbers<[1], [0], [0], [1], [0, 0, 1, 1], [], []>} : vector<8x64xf32>, vector<64x256xf32>, vector<8x256xf32> -> vector<8x256xf32>
    %c6 = arith.constant 6 : index
    %c0_26 = arith.constant 0 : index
    %c0_27 = arith.constant 0 : index
    %114 = vector.load %arg0[%c6, %c0_26, %c0_27] : memref<8x8x256xf32, #tpu.memory_space<vmem>>, vector<1x8x256xf32>
    %115 = vector.shape_cast %114 : vector<1x8x256xf32> to vector<8x256xf32>
    %116 = arith.addf %113, %115 : vector<8x256xf32>
    %117 = arith.negf %116 : vector<8x256xf32>
    %118 = math.exp %117 : vector<8x256xf32>
    %cst_28 = arith.constant 1.000000e+00 : f32
    %119 = vector.broadcast %cst_28 : f32 to vector<8x256xf32>
    %120 = arith.addf %119, %118 : vector<8x256xf32>
    %121 = arith.divf %119, %120 : vector<8x256xf32>
    %122 = math.tanh %116 : vector<8x256xf32>
    %123 = vector.extract_strided_slice %121 {offsets = [0, 0], sizes = [8, 64], strides = [1, 1]} : vector<8x256xf32> to vector<8x64xf32>
    %124 = vector.extract_strided_slice %121 {offsets = [0, 64], sizes = [8, 64], strides = [1, 1]} : vector<8x256xf32> to vector<8x64xf32>
    %125 = vector.extract_strided_slice %122 {offsets = [0, 128], sizes = [8, 64], strides = [1, 1]} : vector<8x256xf32> to vector<8x64xf32>
    %126 = vector.extract_strided_slice %121 {offsets = [0, 192], sizes = [8, 64], strides = [1, 1]} : vector<8x256xf32> to vector<8x64xf32>
    %127 = arith.mulf %124, %110 : vector<8x64xf32>
    %128 = arith.mulf %123, %125 : vector<8x64xf32>
    %129 = arith.addf %127, %128 : vector<8x64xf32>
    %130 = math.tanh %129 : vector<8x64xf32>
    %131 = arith.mulf %126, %130 : vector<8x64xf32>
    %cst_29 = arith.constant dense<0.000000e+00> : vector<8x256xf32>
    %132 = tpu.matmul %131, %0, %cst_29 {dimension_numbers = #tpu.dot_dimension_numbers<[1], [0], [0], [1], [0, 0, 1, 1], [], []>} : vector<8x64xf32>, vector<64x256xf32>, vector<8x256xf32> -> vector<8x256xf32>
    %c7 = arith.constant 7 : index
    %c0_30 = arith.constant 0 : index
    %c0_31 = arith.constant 0 : index
    %133 = vector.load %arg0[%c7, %c0_30, %c0_31] : memref<8x8x256xf32, #tpu.memory_space<vmem>>, vector<1x8x256xf32>
    %134 = vector.shape_cast %133 : vector<1x8x256xf32> to vector<8x256xf32>
    %135 = arith.addf %132, %134 : vector<8x256xf32>
    %136 = arith.negf %135 : vector<8x256xf32>
    %137 = math.exp %136 : vector<8x256xf32>
    %cst_32 = arith.constant 1.000000e+00 : f32
    %138 = vector.broadcast %cst_32 : f32 to vector<8x256xf32>
    %139 = arith.addf %138, %137 : vector<8x256xf32>
    %140 = arith.divf %138, %139 : vector<8x256xf32>
    %141 = math.tanh %135 : vector<8x256xf32>
    %142 = vector.extract_strided_slice %140 {offsets = [0, 0], sizes = [8, 64], strides = [1, 1]} : vector<8x256xf32> to vector<8x64xf32>
    %143 = vector.extract_strided_slice %140 {offsets = [0, 64], sizes = [8, 64], strides = [1, 1]} : vector<8x256xf32> to vector<8x64xf32>
    %144 = vector.extract_strided_slice %141 {offsets = [0, 128], sizes = [8, 64], strides = [1, 1]} : vector<8x256xf32> to vector<8x64xf32>
    %145 = vector.extract_strided_slice %140 {offsets = [0, 192], sizes = [8, 64], strides = [1, 1]} : vector<8x256xf32> to vector<8x64xf32>
    %146 = arith.mulf %143, %129 : vector<8x64xf32>
    %147 = arith.mulf %142, %144 : vector<8x64xf32>
    %148 = arith.addf %146, %147 : vector<8x64xf32>
    %149 = math.tanh %148 : vector<8x64xf32>
    %150 = arith.mulf %145, %149 : vector<8x64xf32>
    %cst_33 = arith.constant dense<0.000000e+00> : vector<8x256xf32>
    %151 = tpu.matmul %150, %0, %cst_33 {dimension_numbers = #tpu.dot_dimension_numbers<[1], [0], [0], [1], [0, 0, 1, 1], [], []>} : vector<8x64xf32>, vector<64x256xf32>, vector<8x256xf32> -> vector<8x256xf32>
    %c7_34 = arith.constant 7 : index
    %c0_35 = arith.constant 0 : index
    %c0_36 = arith.constant 0 : index
    %152 = vector.load %arg0[%c7_34, %c0_35, %c0_36] : memref<8x8x256xf32, #tpu.memory_space<vmem>>, vector<1x8x256xf32>
    %153 = vector.shape_cast %152 : vector<1x8x256xf32> to vector<8x256xf32>
    %154 = arith.addf %151, %153 : vector<8x256xf32>
    %155 = arith.negf %154 : vector<8x256xf32>
    %156 = math.exp %155 : vector<8x256xf32>
    %cst_37 = arith.constant 1.000000e+00 : f32
    %157 = vector.broadcast %cst_37 : f32 to vector<8x256xf32>
    %158 = arith.addf %157, %156 : vector<8x256xf32>
    %159 = arith.divf %157, %158 : vector<8x256xf32>
    %160 = math.tanh %154 : vector<8x256xf32>
    %161 = vector.extract_strided_slice %159 {offsets = [0, 0], sizes = [8, 64], strides = [1, 1]} : vector<8x256xf32> to vector<8x64xf32>
    %162 = vector.extract_strided_slice %159 {offsets = [0, 64], sizes = [8, 64], strides = [1, 1]} : vector<8x256xf32> to vector<8x64xf32>
    %163 = vector.extract_strided_slice %160 {offsets = [0, 128], sizes = [8, 64], strides = [1, 1]} : vector<8x256xf32> to vector<8x64xf32>
    %164 = vector.extract_strided_slice %159 {offsets = [0, 192], sizes = [8, 64], strides = [1, 1]} : vector<8x256xf32> to vector<8x64xf32>
    %165 = arith.mulf %162, %148 : vector<8x64xf32>
    %166 = arith.mulf %161, %163 : vector<8x64xf32>
    %167 = arith.addf %165, %166 : vector<8x64xf32>
    %168 = math.tanh %167 : vector<8x64xf32>
    %169 = arith.mulf %164, %168 : vector<8x64xf32>
    %170 = vector.extract_strided_slice %169 {offsets = [0, 32], sizes = [8, 32], strides = [1, 1]} : vector<8x64xf32> to vector<8x32xf32>
    %c0_38 = arith.constant 0 : index
    %c0_39 = arith.constant 0 : index
    %171 = vector.load %arg2[%c0_38, %c0_39] : memref<32x5xf32, #tpu.memory_space<vmem>>, vector<32x5xf32>
    %cst_40 = arith.constant dense<0.000000e+00> : vector<8x5xf32>
    %172 = tpu.matmul %170, %171, %cst_40 {dimension_numbers = #tpu.dot_dimension_numbers<[1], [0], [0], [1], [0, 0, 1, 1], [], []>} : vector<8x32xf32>, vector<32x5xf32>, vector<8x5xf32> -> vector<8x5xf32>
    %c0_41 = arith.constant 0 : index
    %c0_42 = arith.constant 0 : index
    %173 = vector.load %arg3[%c0_41, %c0_42] : memref<1x5xf32, #tpu.memory_space<vmem>>, vector<1x5xf32>
    %174 = vector.broadcast %173 : vector<1x5xf32> to vector<8x5xf32>
    %175 = arith.addf %172, %174 : vector<8x5xf32>
    %cst_43 = arith.constant dense<0xFF800000> : vector<5xf32>
    %176 = vector.multi_reduction <maximumf>, %175, %cst_43 [0] : vector<8x5xf32> to vector<5xf32>
    %177 = vector.shape_cast %176 : vector<5xf32> to vector<1x5xf32>
    %178 = vector.broadcast %177 : vector<1x5xf32> to vector<8x5xf32>
    %179 = arith.subf %175, %178 : vector<8x5xf32>
    %180 = math.exp %179 : vector<8x5xf32>
    %cst_44 = arith.constant dense<0.000000e+00> : vector<5xf32>
    %181 = vector.multi_reduction <add>, %180, %cst_44 [0] : vector<8x5xf32> to vector<5xf32>
    %182 = vector.shape_cast %181 : vector<5xf32> to vector<1x5xf32>
    %183 = tpu.reciprocal %182 : vector<1x5xf32> -> vector<1x5xf32>
    %184 = vector.broadcast %183 : vector<1x5xf32> to vector<8x5xf32>
    %185 = arith.mulf %180, %184 : vector<8x5xf32>
    %c0_45 = arith.constant 0 : index
    %c0_46 = arith.constant 0 : index
    %186 = vector.load %arg4[%c0_45, %c0_46] : memref<8x5xf32, #tpu.memory_space<vmem>>, vector<8x5xf32>
    tpu.vector_store %arg4[%c0_45, %c0_46], %185 {strides = array<i32>} : memref<8x5xf32, #tpu.memory_space<vmem>>, vector<8x5xf32>,
    return
  }
}

</mosaic_0001>

<llo_original>
// kernel: tpu_custom_call.1
$region0: #{tpu_custom_call.1}
  #allocation0 [shape = 'u32[]', space=smem, size = 0x4, offset = 0x4, fixed_abs, tag = 'smem constant byte address 0x4 - core index']
  #allocation1 [shape = 'u32[144,128]{1,0:T(1,128)}', space=vmem, size = 0x12000, scoped, tag = 'internal scratch']
  %s0 = inlined_call_operand.hbm [shape: f32[8,8,256], index: 0, kind: input, shape index: {}]
  %s1 = inlined_call_operand.hbm [shape: f32[64,256], index: 1, kind: input, shape index: {}]
  %s2 = inlined_call_operand.vmem [shape: f32[32,5], index: 2, kind: input, shape index: {}]
  %s3 = inlined_call_operand.vmem [shape: f32[1,5], index: 3, kind: input, shape index: {}]
  %s4 = inlined_call_operand.hbm [shape: f32[8,5], index: 4, kind: output, shape index: {}]
  %s5 = sld [smem:[#allocation0]]
  $region34: #{tpu_custom_call.1} parent=0
    _
  %s7 = ssub.s32 1, %s5
  %s8 = scalar_select 0, %s7, %s5
  $region1: #{tpu_custom_call.1} parent=0
    #allocation2 [shape = 'u8[65536]{0}', space=vmem, size = 0x10000, scoped, tag = 'input window, operand 0, single buffered']
    #allocation3 [shape = 's32[1]{0}', space=sflag, size = 0x4, scoped, tag = 'scoped memory for tpu_custom_call.1']
    #allocation4 [shape = 's32[1]{0}', space=sflag, size = 0x4, scoped, tag = 'scoped memory for tpu_custom_call.1']
    #allocation5 [shape = 'u8[65536]{0}', space=vmem, size = 0x10000, scoped, tag = 'input window, operand 1, single buffered']
    #allocation6 [shape = 's32[1]{0}', space=sflag, size = 0x4, scoped, tag = 'scoped memory for tpu_custom_call.1']
    #allocation7 [shape = 'u8[4096]{0}', space=vmem, size = 0x1000, scoped, tag = 'output window, operand 0, single buffered']
    %9 = vsyncpa [#allocation3], 0
    %10 = vsyncpa [#allocation6], 0
    %11 = vsyncpa [#allocation4], 0
    // Predicated region
    $region2: #{tpu_custom_call.1} parent=1 // pred_check
      _
    $region3: #{tpu_custom_call.1} parent=1 // pred_check_branch
      %13 = sbr.rel (0) target = $region5
    $region4: #{tpu_custom_call.1} parent=1 // pred_region
      %s15 = ssub.s32 2048, 2048
      %16 = vsyncadd [#allocation3], %s15
      %s17 = sshll.u32 [#allocation2], 4
      %s18 = int_to_ptr.vmem [resolvable:$true] %s17
      %23 = dma.hbm_to_vmem [thread:$0]  %s0, 2048, %s18, [#allocation3], 256, 256, 16
    $region5: #{tpu_custom_call.1} parent=1 // pred_fallthru
      _
    // Predicated region
    $region6: #{tpu_custom_call.1} parent=1 // pred_check
      _
    $region7: #{tpu_custom_call.1} parent=1 // pred_check_branch
      %25 = sbr.rel (0) target = $region9
    $region8: #{tpu_custom_call.1} parent=1 // pred_region
      %s27 = ssub.s32 2048, 2048
      %28 = vsyncadd [#allocation6], %s27
      %s29 = sshll.u32 [#allocation5], 4
      %s30 = int_to_ptr.vmem [resolvable:$true] %s29
      %35 = dma.hbm_to_vmem [thread:$0]  %s1, 2048, %s30, [#allocation6], 256, 256, 16
    $region9: #{tpu_custom_call.1} parent=1 // pred_fallthru
      _
    // Predicated region
    $region10: #{tpu_custom_call.1} parent=1 // pred_check
      _
    $region11: #{tpu_custom_call.1} parent=1 // pred_check_branch
      %37 = sbr.rel (0) target = $region13
    $region12: #{tpu_custom_call.1} parent=1 // pred_region
      _
    $region13: #{tpu_custom_call.1} parent=1 // pred_fallthru
      _
    // Predicated region
    $region14: #{tpu_custom_call.1} parent=1 // pred_check
      _
    $region15: #{tpu_custom_call.1} parent=1 // pred_check_branch
      %39 = sbr.rel (0) target = $region17
    $region16: #{tpu_custom_call.1} parent=1 // pred_region
      _
    $region17: #{tpu_custom_call.1} parent=1 // pred_fallthru
      _
    // Predicated region
    $region18: #{tpu_custom_call.1} parent=1 // pred_check
      _
    $region19: #{tpu_custom_call.1} parent=1 // pred_check_branch
      %41 = sbr.rel (0) target = $region21
    $region20: #{tpu_custom_call.1} parent=1 // pred_region
      %42 = dma.done [#allocation3], 2048
    $region21: #{tpu_custom_call.1} parent=1 // pred_fallthru
      _
    // Predicated region
    $region22: #{tpu_custom_call.1} parent=1 // pred_check
      _
    $region23: #{tpu_custom_call.1} parent=1 // pred_check_branch
      %44 = sbr.rel (0) target = $region25
    $region24: #{tpu_custom_call.1} parent=1 // pred_region
      %45 = dma.done [#allocation6], 2048
    $region25: #{tpu_custom_call.1} parent=1 // pred_fallthru
      _
    %v46 = vld [vmem:[#allocation5] sm:$0xff]
    %v47 = vld [vmem:[#allocation5 + $0x8] sm:$0xff]
    %v48 = vld [vmem:[#allocation5 + $0x10] sm:$0xff]
    %v49 = vld [vmem:[#allocation5 + $0x18] sm:$0xff]
    %v50 = vld [vmem:[#allocation5 + $0x20] sm:$0xff]
    %v51 = vld [vmem:[#allocation5 + $0x28] sm:$0xff]
    %v52 = vld [vmem:[#allocation5 + $0x30] sm:$0xff]
    %v53 = vld [vmem:[#allocation5 + $0x38] sm:$0xff]
    %v54 = vld [vmem:[#allocation5 + $0x40] sm:$0xff]
    %v55 = vld [vmem:[#allocation5 + $0x48] sm:$0xff]
    %v56 = vld [vmem:[#allocation5 + $0x50] sm:$0xff]
    %v57 = vld [vmem:[#allocation5 + $0x58] sm:$0xff]
    %v58 = vld [vmem:[#allocation5 + $0x60] sm:$0xff]
    %v59 = vld [vmem:[#allocation5 + $0x68] sm:$0xff]
    %v60 = vld [vmem:[#allocation5 + $0x70] sm:$0xff]
    %v61 = vld [vmem:[#allocation5 + $0x78] sm:$0xff]
    %v62 = vld [vmem:[#allocation2] sm:$0xff]
    %v63 = vld [vmem:[#allocation2 + $0x8] sm:$0xff]
    %v64 = vxor.u32 %v62, 2147483648
    %v65 = vxor.u32 %v63, 2147483648
    %v66 = vmul.f32 %v64, 1.442695
    %v67 = vpow.pop %v66
    %v68 = vmul.f32 %v65, 1.442695
    %v69 = vpow.pop %v68
    %v70 = vadd.f32 %v67, 1.0
    %v71 = vadd.f32 %v69, 1.0
    %v72 = vrcp.pop %v70
    %v73 = vmul.f32 1.0, %v72
    %v74 = vrcp.pop %v71
    %v75 = vmul.f32 1.0, %v74
    %v76 = vtanh.pop %v63
    %v77 = vmul.f32 %v73, %v76
    %v78 = vtanh.pop %v77
    %80 = vrot.lane.b32.xlu0 %v78, 64
    %v81 = vpop.permute.xlu0 %80
    %v83 = vmul.f32 %v75, %v81
    %85 = vrot.lane.b32.xlu0 %v83, 64
    %v86 = vpop.permute.xlu0 %85
    %vm88 = vcmask 261120
    %v89 = vsel %vm88, %v86, 0.0
    %v90 = vsel %vm88, %v77, 0.0
    %s91 = scalar_lea.vmem [#allocation2], 16
    %v92 = vld [vmem:[%s91] sm:$0xff]
    %v93 = vld [vmem:[%s91 + $0x8] sm:$0xff]
    %vm94 = vcmask 523264
    %v96 = vsel %vm94, %v89, 0
    %98 = vmatprep.subr.mxu0 0.0
    %99 = vmatpush1.msra.mxu0 0.0
    %100 = vmatprep.subr.mxu0 0.0
    %101 = vmatpush1.msra.mxu0 0.0
    %102 = vmatprep.subr.mxu0 0.0
    %103 = vmatpush1.msra.mxu0 0.0
    %104 = vmatprep.subr.mxu0 0.0
    %105 = vmatpush1.msra.mxu0 0.0
    %106 = vmatprep.subr.mxu0 0.0
    %107 = vmatpush1.msra.mxu0 0.0
    %108 = vmatprep.subr.mxu0 0.0
    %109 = vmatpush1.msra.mxu0 0.0
    %110 = vmatprep.subr.mxu0 0.0
    %111 = vmatpush1.msra.mxu0 0.0
    %112 = vmatprep.subr.mxu0 0.0
    %113 = vmatpush1.msra.mxu0 0.0
    %114 = vmatprep.subr.mxu0 %v61
    %115 = vmatpush1.msra.mxu0 %v60
    %116 = vmatprep.subr.mxu0 %v59
    %117 = vmatpush1.msra.mxu0 %v58
    %118 = vmatprep.subr.mxu0 %v57
    %119 = vmatpush1.msra.mxu0 %v56
    %120 = vmatprep.subr.mxu0 %v55
    %121 = vmatpush1.msra.mxu0 %v54
    %122 = vmatprep.subr.mxu0 %v53
    %123 = vmatpush1.msra.mxu0 %v52
    %124 = vmatprep.subr.mxu0 %v51
    %125 = vmatpush1.msra.mxu0 %v50
    %126 = vmatprep.subr.mxu0 %v49
    %127 = vmatpush1.msra.mxu0 %v48
    %128 = vmatprep.subr.mxu0 %v47
    %129 = vmatpush1.msra.mxu0 %v46
    %130 = vmatprep.subr.mxu0 0.0
    %131 = vmatpush2.msra.mxu0 0.0
    %132 = vmatprep.subr.mxu0 0.0
    %133 = vmatpush2.msra.mxu0 0.0
    %134 = vmatprep.subr.mxu0 0.0
    %135 = vmatpush2.msra.mxu0 0.0
    %136 = vmatprep.subr.mxu0 0.0
    %137 = vmatpush2.msra.mxu0 0.0
    %138 = vmatprep.subr.mxu0 0.0
    %139 = vmatpush2.msra.mxu0 0.0
    %140 = vmatprep.subr.mxu0 0.0
    %141 = vmatpush2.msra.mxu0 0.0
    %142 = vmatprep.subr.mxu0 0.0
    %143 = vmatpush2.msra.mxu0 0.0
    %144 = vmatprep.subr.mxu0 0.0
    %145 = vmatpush2.msra.mxu0 0.0
    %146 = vmatprep.subr.mxu0 0.0
    %147 = vmatpush2.msra.mxu0 0.0
    %148 = vmatprep.subr.mxu0 0.0
    %149 = vmatpush2.msra.mxu0 0.0
    %150 = vmatprep.subr.mxu0 0.0
    %151 = vmatpush2.msra.mxu0 0.0
    %152 = vmatprep.subr.mxu0 0.0
    %153 = vmatpush2.msra.mxu0 0.0
    %154 = vmatprep.subr.mxu0 0.0
    %155 = vmatpush2.msra.mxu0 0.0
    %156 = vmatprep.subr.mxu0 0.0
    %157 = vmatpush2.msra.mxu0 0.0
    %158 = vmatprep.subr.mxu0 0.0
    %159 = vmatpush2.msra.mxu0 0.0
    %160 = vmatprep.subr.mxu0 0.0
    %161 = vmatpush2.msra.mxu0 0.0
    %162 = vmatprep.mubr.f32.mxu0 0.0
    %163 = vmatmul.mubr.f32.gmra.mxu0 %v96
    %v164 = vpop.f32.mrf.mxu0
    %v165 = vadd.f32 %v92, %v164
    %v166 = vpop.f32.mrf.mxu0
    %v167 = vadd.f32 %v93, %v166
    %168 = vdwg.mxu0
    %v169 = vxor.u32 %v165, 2147483648
    %v170 = vxor.u32 %v167, 2147483648
    %v171 = vmul.f32 %v169, 1.442695
    %v172 = vpow.pop %v171
    %v173 = vmul.f32 %v170, 1.442695
    %v174 = vpow.pop %v173
    %v175 = vadd.f32 %v172, 1.0
    %v176 = vadd.f32 %v174, 1.0
    %v177 = vrcp.pop %v175
    %v178 = vmul.f32 1.0, %v177
    %v179 = vrcp.pop %v176
    %v180 = vmul.f32 1.0, %v179
    %v181 = vtanh.pop %v167
    %183 = vrot.lane.b32.xlu0 %v90, 64
    %v184 = vpop.permute.xlu0 %183
    %v186 = vmul.f32 %v178, %v184
    %v187 = vmul.f32 %v178, %v181
    %189 = vrot.lane.b32.xlu0 %v187, 64
    %v190 = vpop.permute.xlu0 %189
    %v192 = vadd.f32 %v186, %v190
    %v193 = vtanh.pop %v192
    %v194 = vmul.f32 %v180, %v193
    %s195 = scalar_lea.vmem [#allocation2], 32
    %v196 = vld [vmem:[%s195] sm:$0xff]
    %v197 = vld [vmem:[%s195 + $0x8] sm:$0xff]
    %199 = vrot.lane.b32.xlu0 %v194, 64
    %v200 = vpop.permute.xlu0 %199
    %v201 = vsel %vm94, %v200, 0
    %203 = vmatprep.subr.mxu0 0.0
    %204 = vmatpush1.msra.mxu0 0.0
    %205 = vmatprep.subr.mxu0 0.0
    %206 = vmatpush1.msra.mxu0 0.0
    %207 = vmatprep.subr.mxu0 0.0
    %208 = vmatpush1.msra.mxu0 0.0
    %209 = vmatprep.subr.mxu0 0.0
    %210 = vmatpush1.msra.mxu0 0.0
    %211 = vmatprep.subr.mxu0 0.0
    %212 = vmatpush1.msra.mxu0 0.0
    %213 = vmatprep.subr.mxu0 0.0
    %214 = vmatpush1.msra.mxu0 0.0
    %215 = vmatprep.subr.mxu0 0.0
    %216 = vmatpush1.msra.mxu0 0.0
    %217 = vmatprep.subr.mxu0 0.0
    %218 = vmatpush1.msra.mxu0 0.0
    %219 = vmatprep.subr.mxu0 %v61
    %220 = vmatpush1.msra.mxu0 %v60
    %221 = vmatprep.subr.mxu0 %v59
    %222 = vmatpush1.msra.mxu0 %v58
    %223 = vmatprep.subr.mxu0 %v57
    %224 = vmatpush1.msra.mxu0 %v56
    %225 = vmatprep.subr.mxu0 %v55
    %226 = vmatpush1.msra.mxu0 %v54
    %227 = vmatprep.subr.mxu0 %v53
    %228 = vmatpush1.msra.mxu0 %v52
    %229 = vmatprep.subr.mxu0 %v51
    %230 = vmatpush1.msra.mxu0 %v50
    %231 = vmatprep.subr.mxu0 %v49
    %232 = vmatpush1.msra.mxu0 %v48
    %233 = vmatprep.subr.mxu0 %v47
    %234 = vmatpush1.msra.mxu0 %v46
    %235 = vmatprep.subr.mxu0 0.0
    %236 = vmatpush2.msra.mxu0 0.0
    %237 = vmatprep.subr.mxu0 0.0
    %238 = vmatpush2.msra.mxu0 0.0
    %239 = vmatprep.subr.mxu0 0.0
    %240 = vmatpush2.msra.mxu0 0.0
    %241 = vmatprep.subr.mxu0 0.0
    %242 = vmatpush2.msra.mxu0 0.0
    %243 = vmatprep.subr.mxu0 0.0
    %244 = vmatpush2.msra.mxu0 0.0
    %245 = vmatprep.subr.mxu0 0.0
    %246 = vmatpush2.msra.mxu0 0.0
    %247 = vmatprep.subr.mxu0 0.0
    %248 = vmatpush2.msra.mxu0 0.0
    %249 = vmatprep.subr.mxu0 0.0
    %250 = vmatpush2.msra.mxu0 0.0
    %251 = vmatprep.subr.mxu0 0.0
    %252 = vmatpush2.msra.mxu0 0.0
    %253 = vmatprep.subr.mxu0 0.0
    %254 = vmatpush2.msra.mxu0 0.0
    %255 = vmatprep.subr.mxu0 0.0
    %256 = vmatpush2.msra.mxu0 0.0
    %257 = vmatprep.subr.mxu0 0.0
    %258 = vmatpush2.msra.mxu0 0.0
    %259 = vmatprep.subr.mxu0 0.0
    %260 = vmatpush2.msra.mxu0 0.0
    %261 = vmatprep.subr.mxu0 0.0
    %262 = vmatpush2.msra.mxu0 0.0
    %263 = vmatprep.subr.mxu0 0.0
    %264 = vmatpush2.msra.mxu0 0.0
    %265 = vmatprep.subr.mxu0 0.0
    %266 = vmatpush2.msra.mxu0 0.0
    %267 = vmatprep.mubr.f32.mxu0 0.0
    %268 = vmatmul.mubr.f32.gmra.mxu0 %v201
    %v269 = vpop.f32.mrf.mxu0
    %v270 = vadd.f32 %v196, %v269
    %v271 = vpop.f32.mrf.mxu0
    %v272 = vadd.f32 %v197, %v271
    %273 = vdwg.mxu0
    %v274 = vxor.u32 %v270, 2147483648
    %v275 = vxor.u32 %v272, 2147483648
    %v276 = vmul.f32 %v274, 1.442695
    %v277 = vpow.pop %v276
    %v278 = vmul.f32 %v275, 1.442695
    %v279 = vpow.pop %v278
    %v280 = vadd.f32 %v277, 1.0
    %v281 = vadd.f32 %v279, 1.0
    %v282 = vrcp.pop %v280
    %v283 = vmul.f32 1.0, %v282
    %v284 = vrcp.pop %v281
    %v285 = vmul.f32 1.0, %v284
    %v286 = vtanh.pop %v272
    %v287 = vmul.f32 %v283, %v192
    %v288 = vmul.f32 %v283, %v286
    %290 = vrot.lane.b32.xlu0 %v288, 64
    %v291 = vpop.permute.xlu0 %290
    %v293 = vadd.f32 %v287, %v291
    %v294 = vtanh.pop %v293
    %v295 = vmul.f32 %v285, %v294
    %s296 = scalar_lea.vmem [#allocation2], 48
    %v297 = vld [vmem:[%s296] sm:$0xff]
    %v298 = vld [vmem:[%s296 + $0x8] sm:$0xff]
    %300 = vrot.lane.b32.xlu0 %v295, 64
    %v301 = vpop.permute.xlu0 %300
    %v302 = vsel %vm94, %v301, 0
    %304 = vmatprep.subr.mxu0 0.0
    %305 = vmatpush1.msra.mxu0 0.0
    %306 = vmatprep.subr.mxu0 0.0
    %307 = vmatpush1.msra.mxu0 0.0
    %308 = vmatprep.subr.mxu0 0.0
    %309 = vmatpush1.msra.mxu0 0.0
    %310 = vmatprep.subr.mxu0 0.0
    %311 = vmatpush1.msra.mxu0 0.0
    %312 = vmatprep.subr.mxu0 0.0
    %313 = vmatpush1.msra.mxu0 0.0
    %314 = vmatprep.subr.mxu0 0.0
    %315 = vmatpush1.msra.mxu0 0.0
    %316 = vmatprep.subr.mxu0 0.0
    %317 = vmatpush1.msra.mxu0 0.0
    %318 = vmatprep.subr.mxu0 0.0
    %319 = vmatpush1.msra.mxu0 0.0
    %320 = vmatprep.subr.mxu0 %v61
    %321 = vmatpush1.msra.mxu0 %v60
    %322 = vmatprep.subr.mxu0 %v59
    %323 = vmatpush1.msra.mxu0 %v58
    %324 = vmatprep.subr.mxu0 %v57
    %325 = vmatpush1.msra.mxu0 %v56
    %326 = vmatprep.subr.mxu0 %v55
    %327 = vmatpush1.msra.mxu0 %v54
    %328 = vmatprep.subr.mxu0 %v53
    %329 = vmatpush1.msra.mxu0 %v52
    %330 = vmatprep.subr.mxu0 %v51
    %331 = vmatpush1.msra.mxu0 %v50
    %332 = vmatprep.subr.mxu0 %v49
    %333 = vmatpush1.msra.mxu0 %v48
    %334 = vmatprep.subr.mxu0 %v47
    %335 = vmatpush1.msra.mxu0 %v46
    %336 = vmatprep.subr.mxu0 0.0
    %337 = vmatpush2.msra.mxu0 0.0
    %338 = vmatprep.subr.mxu0 0.0
    %339 = vmatpush2.msra.mxu0 0.0
    %340 = vmatprep.subr.mxu0 0.0
    %341 = vmatpush2.msra.mxu0 0.0
    %342 = vmatprep.subr.mxu0 0.0
    %343 = vmatpush2.msra.mxu0 0.0
    %344 = vmatprep.subr.mxu0 0.0
    %345 = vmatpush2.msra.mxu0 0.0
    %346 = vmatprep.subr.mxu0 0.0
    %347 = vmatpush2.msra.mxu0 0.0
    %348 = vmatprep.subr.mxu0 0.0
    %349 = vmatpush2.msra.mxu0 0.0
    %350 = vmatprep.subr.mxu0 0.0
    %351 = vmatpush2.msra.mxu0 0.0
    %352 = vmatprep.subr.mxu0 0.0
    %353 = vmatpush2.msra.mxu0 0.0
    %354 = vmatprep.subr.mxu0 0.0
    %355 = vmatpush2.msra.mxu0 0.0
    %356 = vmatprep.subr.mxu0 0.0
    %357 = vmatpush2.msra.mxu0 0.0
    %358 = vmatprep.subr.mxu0 0.0
    %359 = vmatpush2.msra.mxu0 0.0
    %360 = vmatprep.subr.mxu0 0.0
    %361 = vmatpush2.msra.mxu0 0.0
    %362 = vmatprep.subr.mxu0 0.0
    %363 = vmatpush2.msra.mxu0 0.0
    %364 = vmatprep.subr.mxu0 0.0
    %365 = vmatpush2.msra.mxu0 0.0
    %366 = vmatprep.subr.mxu0 0.0
    %367 = vmatpush2.msra.mxu0 0.0
    %368 = vmatprep.mubr.f32.mxu0 0.0
    %369 = vmatmul.mubr.f32.gmra.mxu0 %v302
    %v370 = vpop.f32.mrf.mxu0
    %v371 = vadd.f32 %v297, %v370
    %v372 = vpop.f32.mrf.mxu0
    %v373 = vadd.f32 %v298, %v372
    %374 = vdwg.mxu0
    %v375 = vxor.u32 %v371, 2147483648
    %v376 = vxor.u32 %v373, 2147483648
    %v377 = vmul.f32 %v375, 1.442695
    %v378 = vpow.pop %v377
    %v379 = vmul.f32 %v376, 1.442695
    %v380 = vpow.pop %v379
    %v381 = vadd.f32 %v378, 1.0
    %v382 = vadd.f32 %v380, 1.0
    %v383 = vrcp.pop %v381
    %v384 = vmul.f32 1.0, %v383
    %v385 = vrcp.pop %v382
    %v386 = vmul.f32 1.0, %v385
    %v387 = vtanh.pop %v373
    %v388 = vmul.f32 %v384, %v293
    %v389 = vmul.f32 %v384, %v387
    %391 = vrot.lane.b32.xlu0 %v389, 64
    %v392 = vpop.permute.xlu0 %391
    %v394 = vadd.f32 %v388, %v392
    %v395 = vtanh.pop %v394
    %v396 = vmul.f32 %v386, %v395
    %s397 = scalar_lea.vmem [#allocation2], 64
    %v398 = vld [vmem:[%s397] sm:$0xff]
    %v399 = vld [vmem:[%s397 + $0x8] sm:$0xff]
    %401 = vrot.lane.b32.xlu0 %v396, 64
    %v402 = vpop.permute.xlu0 %401
    %v403 = vsel %vm94, %v402, 0
    %405 = vmatprep.subr.mxu0 0.0
    %406 = vmatpush1.msra.mxu0 0.0
    %407 = vmatprep.subr.mxu0 0.0
    %408 = vmatpush1.msra.mxu0 0.0
    %409 = vmatprep.subr.mxu0 0.0
    %410 = vmatpush1.msra.mxu0 0.0
    %411 = vmatprep.subr.mxu0 0.0
    %412 = vmatpush1.msra.mxu0 0.0
    %413 = vmatprep.subr.mxu0 0.0
    %414 = vmatpush1.msra.mxu0 0.0
    %415 = vmatprep.subr.mxu0 0.0
    %416 = vmatpush1.msra.mxu0 0.0
    %417 = vmatprep.subr.mxu0 0.0
    %418 = vmatpush1.msra.mxu0 0.0
    %419 = vmatprep.subr.mxu0 0.0
    %420 = vmatpush1.msra.mxu0 0.0
    %421 = vmatprep.subr.mxu0 %v61
    %422 = vmatpush1.msra.mxu0 %v60
    %423 = vmatprep.subr.mxu0 %v59
    %424 = vmatpush1.msra.mxu0 %v58
    %425 = vmatprep.subr.mxu0 %v57
    %426 = vmatpush1.msra.mxu0 %v56
    %427 = vmatprep.subr.mxu0 %v55
    %428 = vmatpush1.msra.mxu0 %v54
    %429 = vmatprep.subr.mxu0 %v53
    %430 = vmatpush1.msra.mxu0 %v52
    %431 = vmatprep.subr.mxu0 %v51
    %432 = vmatpush1.msra.mxu0 %v50
    %433 = vmatprep.subr.mxu0 %v49
    %434 = vmatpush1.msra.mxu0 %v48
    %435 = vmatprep.subr.mxu0 %v47
    %436 = vmatpush1.msra.mxu0 %v46
    %437 = vmatprep.subr.mxu0 0.0
    %438 = vmatpush2.msra.mxu0 0.0
    %439 = vmatprep.subr.mxu0 0.0
    %440 = vmatpush2.msra.mxu0 0.0
    %441 = vmatprep.subr.mxu0 0.0
    %442 = vmatpush2.msra.mxu0 0.0
    %443 = vmatprep.subr.mxu0 0.0
    %444 = vmatpush2.msra.mxu0 0.0
    %445 = vmatprep.subr.mxu0 0.0
    %446 = vmatpush2.msra.mxu0 0.0
    %447 = vmatprep.subr.mxu0 0.0
    %448 = vmatpush2.msra.mxu0 0.0
    %449 = vmatprep.subr.mxu0 0.0
    %450 = vmatpush2.msra.mxu0 0.0
    %451 = vmatprep.subr.mxu0 0.0
    %452 = vmatpush2.msra.mxu0 0.0
    %453 = vmatprep.subr.mxu0 0.0
    %454 = vmatpush2.msra.mxu0 0.0
    %455 = vmatprep.subr.mxu0 0.0
    %456 = vmatpush2.msra.mxu0 0.0
    %457 = vmatprep.subr.mxu0 0.0
    %458 = vmatpush2.msra.mxu0 0.0
    %459 = vmatprep.subr.mxu0 0.0
    %460 = vmatpush2.msra.mxu0 0.0
    %461 = vmatprep.subr.mxu0 0.0
    %462 = vmatpush2.msra.mxu0 0.0
    %463 = vmatprep.subr.mxu0 0.0
    %464 = vmatpush2.msra.mxu0 0.0
    %465 = vmatprep.subr.mxu0 0.0
    %466 = vmatpush2.msra.mxu0 0.0
    %467 = vmatprep.subr.mxu0 0.0
    %468 = vmatpush2.msra.mxu0 0.0
    %469 = vmatprep.mubr.f32.mxu0 0.0
    %470 = vmatmul.mubr.f32.gmra.mxu0 %v403
    %v471 = vpop.f32.mrf.mxu0
    %v472 = vadd.f32 %v398, %v471
    %v473 = vpop.f32.mrf.mxu0
    %v474 = vadd.f32 %v399, %v473
    %475 = vdwg.mxu0
    %v476 = vxor.u32 %v472, 2147483648
    %v477 = vxor.u32 %v474, 2147483648
    %v478 = vmul.f32 %v476, 1.442695
    %v479 = vpow.pop %v478
    %v480 = vmul.f32 %v477, 1.442695
    %v481 = vpow.pop %v480
    %v482 = vadd.f32 %v479, 1.0
    %v483 = vadd.f32 %v481, 1.0
    %v484 = vrcp.pop %v482
    %v485 = vmul.f32 1.0, %v484
    %v486 = vrcp.pop %v483
    %v487 = vmul.f32 1.0, %v486
    %v488 = vtanh.pop %v474
    %v489 = vmul.f32 %v485, %v394
    %v490 = vmul.f32 %v485, %v488
    %492 = vrot.lane.b32.xlu0 %v490, 64
    %v493 = vpop.permute.xlu0 %492
    %v495 = vadd.f32 %v489, %v493
    %v496 = vtanh.pop %v495
    %v497 = vmul.f32 %v487, %v496
    %s498 = scalar_lea.vmem [#allocation2], 80
    %v499 = vld [vmem:[%s498] sm:$0xff]
    %v500 = vld [vmem:[%s498 + $0x8] sm:$0xff]
    %502 = vrot.lane.b32.xlu0 %v497, 64
    %v503 = vpop.permute.xlu0 %502
    %v504 = vsel %vm94, %v503, 0
    %506 = vmatprep.subr.mxu0 0.0
    %507 = vmatpush1.msra.mxu0 0.0
    %508 = vmatprep.subr.mxu0 0.0
    %509 = vmatpush1.msra.mxu0 0.0
    %510 = vmatprep.subr.mxu0 0.0
    %511 = vmatpush1.msra.mxu0 0.0
    %512 = vmatprep.subr.mxu0 0.0
    %513 = vmatpush1.msra.mxu0 0.0
    %514 = vmatprep.subr.mxu0 0.0
    %515 = vmatpush1.msra.mxu0 0.0
    %516 = vmatprep.subr.mxu0 0.0
    %517 = vmatpush1.msra.mxu0 0.0
    %518 = vmatprep.subr.mxu0 0.0
    %519 = vmatpush1.msra.mxu0 0.0
    %520 = vmatprep.subr.mxu0 0.0
    %521 = vmatpush1.msra.mxu0 0.0
    %522 = vmatprep.subr.mxu0 %v61
    %523 = vmatpush1.msra.mxu0 %v60
    %524 = vmatprep.subr.mxu0 %v59
    %525 = vmatpush1.msra.mxu0 %v58
    %526 = vmatprep.subr.mxu0 %v57
    %527 = vmatpush1.msra.mxu0 %v56
    %528 = vmatprep.subr.mxu0 %v55
    %529 = vmatpush1.msra.mxu0 %v54
    %530 = vmatprep.subr.mxu0 %v53
    %531 = vmatpush1.msra.mxu0 %v52
    %532 = vmatprep.subr.mxu0 %v51
    %533 = vmatpush1.msra.mxu0 %v50
    %534 = vmatprep.subr.mxu0 %v49
    %535 = vmatpush1.msra.mxu0 %v48
    %536 = vmatprep.subr.mxu0 %v47
    %537 = vmatpush1.msra.mxu0 %v46
    %538 = vmatprep.subr.mxu0 0.0
    %539 = vmatpush2.msra.mxu0 0.0
    %540 = vmatprep.subr.mxu0 0.0
    %541 = vmatpush2.msra.mxu0 0.0
    %542 = vmatprep.subr.mxu0 0.0
    %543 = vmatpush2.msra.mxu0 0.0
    %544 = vmatprep.subr.mxu0 0.0
    %545 = vmatpush2.msra.mxu0 0.0
    %546 = vmatprep.subr.mxu0 0.0
    %547 = vmatpush2.msra.mxu0 0.0
    %548 = vmatprep.subr.mxu0 0.0
    %549 = vmatpush2.msra.mxu0 0.0
    %550 = vmatprep.subr.mxu0 0.0
    %551 = vmatpush2.msra.mxu0 0.0
    %552 = vmatprep.subr.mxu0 0.0
    %553 = vmatpush2.msra.mxu0 0.0
    %554 = vmatprep.subr.mxu0 0.0
    %555 = vmatpush2.msra.mxu0 0.0
    %556 = vmatprep.subr.mxu0 0.0
    %557 = vmatpush2.msra.mxu0 0.0
    %558 = vmatprep.subr.mxu0 0.0
    %559 = vmatpush2.msra.mxu0 0.0
    %560 = vmatprep.subr.mxu0 0.0
    %561 = vmatpush2.msra.mxu0 0.0
    %562 = vmatprep.subr.mxu0 0.0
    %563 = vmatpush2.msra.mxu0 0.0
    %564 = vmatprep.subr.mxu0 0.0
    %565 = vmatpush2.msra.mxu0 0.0
    %566 = vmatprep.subr.mxu0 0.0
    %567 = vmatpush2.msra.mxu0 0.0
    %568 = vmatprep.subr.mxu0 0.0
    %569 = vmatpush2.msra.mxu0 0.0
    %570 = vmatprep.mubr.f32.mxu0 0.0
    %571 = vmatmul.mubr.f32.gmra.mxu0 %v504
    %v572 = vpop.f32.mrf.mxu0
    %v573 = vadd.f32 %v499, %v572
    %v574 = vpop.f32.mrf.mxu0
    %v575 = vadd.f32 %v500, %v574
    %576 = vdwg.mxu0
    %v577 = vxor.u32 %v573, 2147483648
    %v578 = vxor.u32 %v575, 2147483648
    %v579 = vmul.f32 %v577, 1.442695
    %v580 = vpow.pop %v579
    %v581 = vmul.f32 %v578, 1.442695
    %v582 = vpow.pop %v581
    %v583 = vadd.f32 %v580, 1.0
    %v584 = vadd.f32 %v582, 1.0
    %v585 = vrcp.pop %v583
    %v586 = vmul.f32 1.0, %v585
    %v587 = vrcp.pop %v584
    %v588 = vmul.f32 1.0, %v587
    %v589 = vtanh.pop %v575
    %v590 = vmul.f32 %v586, %v495
    %v591 = vmul.f32 %v586, %v589
    %593 = vrot.lane.b32.xlu0 %v591, 64
    %v594 = vpop.permute.xlu0 %593
    %v596 = vadd.f32 %v590, %v594
    %v597 = vtanh.pop %v596
    %v598 = vmul.f32 %v588, %v597
    %s599 = scalar_lea.vmem [#allocation2], 96
    %v600 = vld [vmem:[%s599] sm:$0xff]
    %v601 = vld [vmem:[%s599 + $0x8] sm:$0xff]
    %603 = vrot.lane.b32.xlu0 %v598, 64
    %v604 = vpop.permute.xlu0 %603
    %v605 = vsel %vm94, %v604, 0
    %607 = vmatprep.subr.mxu0 0.0
    %608 = vmatpush1.msra.mxu0 0.0
    %609 = vmatprep.subr.mxu0 0.0
    %610 = vmatpush1.msra.mxu0 0.0
    %611 = vmatprep.subr.mxu0 0.0
    %612 = vmatpush1.msra.mxu0 0.0
    %613 = vmatprep.subr.mxu0 0.0
    %614 = vmatpush1.msra.mxu0 0.0
    %615 = vmatprep.subr.mxu0 0.0
    %616 = vmatpush1.msra.mxu0 0.0
    %617 = vmatprep.subr.mxu0 0.0
    %618 = vmatpush1.msra.mxu0 0.0
    %619 = vmatprep.subr.mxu0 0.0
    %620 = vmatpush1.msra.mxu0 0.0
    %621 = vmatprep.subr.mxu0 0.0
    %622 = vmatpush1.msra.mxu0 0.0
    %623 = vmatprep.subr.mxu0 %v61
    %624 = vmatpush1.msra.mxu0 %v60
    %625 = vmatprep.subr.mxu0 %v59
    %626 = vmatpush1.msra.mxu0 %v58
    %627 = vmatprep.subr.mxu0 %v57
    %628 = vmatpush1.msra.mxu0 %v56
    %629 = vmatprep.subr.mxu0 %v55
    %630 = vmatpush1.msra.mxu0 %v54
    %631 = vmatprep.subr.mxu0 %v53
    %632 = vmatpush1.msra.mxu0 %v52
    %633 = vmatprep.subr.mxu0 %v51
    %634 = vmatpush1.msra.mxu0 %v50
    %635 = vmatprep.subr.mxu0 %v49
    %636 = vmatpush1.msra.mxu0 %v48
    %637 = vmatprep.subr.mxu0 %v47
    %638 = vmatpush1.msra.mxu0 %v46
    %639 = vmatprep.subr.mxu0 0.0
    %640 = vmatpush2.msra.mxu0 0.0
    %641 = vmatprep.subr.mxu0 0.0
    %642 = vmatpush2.msra.mxu0 0.0
    %643 = vmatprep.subr.mxu0 0.0
    %644 = vmatpush2.msra.mxu0 0.0
    %645 = vmatprep.subr.mxu0 0.0
    %646 = vmatpush2.msra.mxu0 0.0
    %647 = vmatprep.subr.mxu0 0.0
    %648 = vmatpush2.msra.mxu0 0.0
    %649 = vmatprep.subr.mxu0 0.0
    %650 = vmatpush2.msra.mxu0 0.0
    %651 = vmatprep.subr.mxu0 0.0
    %652 = vmatpush2.msra.mxu0 0.0
    %653 = vmatprep.subr.mxu0 0.0
    %654 = vmatpush2.msra.mxu0 0.0
    %655 = vmatprep.subr.mxu0 0.0
    %656 = vmatpush2.msra.mxu0 0.0
    %657 = vmatprep.subr.mxu0 0.0
    %658 = vmatpush2.msra.mxu0 0.0
    %659 = vmatprep.subr.mxu0 0.0
    %660 = vmatpush2.msra.mxu0 0.0
    %661 = vmatprep.subr.mxu0 0.0
    %662 = vmatpush2.msra.mxu0 0.0
    %663 = vmatprep.subr.mxu0 0.0
    %664 = vmatpush2.msra.mxu0 0.0
    %665 = vmatprep.subr.mxu0 0.0
    %666 = vmatpush2.msra.mxu0 0.0
    %667 = vmatprep.subr.mxu0 0.0
    %668 = vmatpush2.msra.mxu0 0.0
    %669 = vmatprep.subr.mxu0 0.0
    %670 = vmatpush2.msra.mxu0 0.0
    %671 = vmatprep.mubr.f32.mxu0 0.0
    %672 = vmatmul.mubr.f32.gmra.mxu0 %v605
    %v673 = vpop.f32.mrf.mxu0
    %v674 = vadd.f32 %v600, %v673
    %v675 = vpop.f32.mrf.mxu0
    %v676 = vadd.f32 %v601, %v675
    %677 = vdwg.mxu0
    %v678 = vxor.u32 %v674, 2147483648
    %v679 = vxor.u32 %v676, 2147483648
    %v680 = vmul.f32 %v678, 1.442695
    %v681 = vpow.pop %v680
    %v682 = vmul.f32 %v679, 1.442695
    %v683 = vpow.pop %v682
    %v684 = vadd.f32 %v681, 1.0
    %v685 = vadd.f32 %v683, 1.0
    %v686 = vrcp.pop %v684
    %v687 = vmul.f32 1.0, %v686
    %v688 = vrcp.pop %v685
    %v689 = vmul.f32 1.0, %v688
    %v690 = vtanh.pop %v676
    %v691 = vmul.f32 %v687, %v596
    %v692 = vmul.f32 %v687, %v690
    %694 = vrot.lane.b32.xlu0 %v692, 64
    %v695 = vpop.permute.xlu0 %694
    %v697 = vadd.f32 %v691, %v695
    %v698 = vtanh.pop %v697
    %v699 = vmul.f32 %v689, %v698
    %s700 = scalar_lea.vmem [#allocation2], 112
    %v701 = vld [vmem:[%s700] sm:$0xff]
    %v702 = vld [vmem:[%s700 + $0x8] sm:$0xff]
    %704 = vrot.lane.b32.xlu0 %v699, 64
    %v705 = vpop.permute.xlu0 %704
    %v706 = vsel %vm94, %v705, 0
    %708 = vmatprep.subr.mxu0 0.0
    %709 = vmatpush1.msra.mxu0 0.0
    %710 = vmatprep.subr.mxu0 0.0
    %711 = vmatpush1.msra.mxu0 0.0
    %712 = vmatprep.subr.mxu0 0.0
    %713 = vmatpush1.msra.mxu0 0.0
    %714 = vmatprep.subr.mxu0 0.0
    %715 = vmatpush1.msra.mxu0 0.0
    %716 = vmatprep.subr.mxu0 0.0
    %717 = vmatpush1.msra.mxu0 0.0
    %718 = vmatprep.subr.mxu0 0.0
    %719 = vmatpush1.msra.mxu0 0.0
    %720 = vmatprep.subr.mxu0 0.0
    %721 = vmatpush1.msra.mxu0 0.0
    %722 = vmatprep.subr.mxu0 0.0
    %723 = vmatpush1.msra.mxu0 0.0
    %724 = vmatprep.subr.mxu0 %v61
    %725 = vmatpush1.msra.mxu0 %v60
    %726 = vmatprep.subr.mxu0 %v59
    %727 = vmatpush1.msra.mxu0 %v58
    %728 = vmatprep.subr.mxu0 %v57
    %729 = vmatpush1.msra.mxu0 %v56
    %730 = vmatprep.subr.mxu0 %v55
    %731 = vmatpush1.msra.mxu0 %v54
    %732 = vmatprep.subr.mxu0 %v53
    %733 = vmatpush1.msra.mxu0 %v52
    %734 = vmatprep.subr.mxu0 %v51
    %735 = vmatpush1.msra.mxu0 %v50
    %736 = vmatprep.subr.mxu0 %v49
    %737 = vmatpush1.msra.mxu0 %v48
    %738 = vmatprep.subr.mxu0 %v47
    %739 = vmatpush1.msra.mxu0 %v46
    %740 = vmatprep.subr.mxu0 0.0
    %741 = vmatpush2.msra.mxu0 0.0
    %742 = vmatprep.subr.mxu0 0.0
    %743 = vmatpush2.msra.mxu0 0.0
    %744 = vmatprep.subr.mxu0 0.0
    %745 = vmatpush2.msra.mxu0 0.0
    %746 = vmatprep.subr.mxu0 0.0
    %747 = vmatpush2.msra.mxu0 0.0
    %748 = vmatprep.subr.mxu0 0.0
    %749 = vmatpush2.msra.mxu0 0.0
    %750 = vmatprep.subr.mxu0 0.0
    %751 = vmatpush2.msra.mxu0 0.0
    %752 = vmatprep.subr.mxu0 0.0
    %753 = vmatpush2.msra.mxu0 0.0
    %754 = vmatprep.subr.mxu0 0.0
    %755 = vmatpush2.msra.mxu0 0.0
    %756 = vmatprep.subr.mxu0 0.0
    %757 = vmatpush2.msra.mxu0 0.0
    %758 = vmatprep.subr.mxu0 0.0
    %759 = vmatpush2.msra.mxu0 0.0
    %760 = vmatprep.subr.mxu0 0.0
    %761 = vmatpush2.msra.mxu0 0.0
    %762 = vmatprep.subr.mxu0 0.0
    %763 = vmatpush2.msra.mxu0 0.0
    %764 = vmatprep.subr.mxu0 0.0
    %765 = vmatpush2.msra.mxu0 0.0
    %766 = vmatprep.subr.mxu0 0.0
    %767 = vmatpush2.msra.mxu0 0.0
    %768 = vmatprep.subr.mxu0 0.0
    %769 = vmatpush2.msra.mxu0 0.0
    %770 = vmatprep.subr.mxu0 0.0
    %771 = vmatpush2.msra.mxu0 0.0
    %772 = vmatprep.mubr.f32.mxu0 0.0
    %773 = vmatmul.mubr.f32.gmra.mxu0 %v706
    %v774 = vpop.f32.mrf.mxu0
    %v775 = vadd.f32 %v701, %v774
    %v776 = vpop.f32.mrf.mxu0
    %v777 = vadd.f32 %v702, %v776
    %778 = vdwg.mxu0
    %v779 = vxor.u32 %v775, 2147483648
    %v780 = vxor.u32 %v777, 2147483648
    %v781 = vmul.f32 %v779, 1.442695
    %v782 = vpow.pop %v781
    %v783 = vmul.f32 %v780, 1.442695
    %v784 = vpow.pop %v783
    %v785 = vadd.f32 %v782, 1.0
    %v786 = vadd.f32 %v784, 1.0
    %v787 = vrcp.pop %v785
    %v788 = vmul.f32 1.0, %v787
    %v789 = vrcp.pop %v786
    %v790 = vmul.f32 1.0, %v789
    %v791 = vtanh.pop %v777
    %v792 = vmul.f32 %v788, %v697
    %v793 = vmul.f32 %v788, %v791
    %795 = vrot.lane.b32.xlu0 %v793, 64
    %v796 = vpop.permute.xlu0 %795
    %v798 = vadd.f32 %v792, %v796
    %v799 = vtanh.pop %v798
    %v800 = vmul.f32 %v790, %v799
    %802 = vrot.lane.b32.xlu0 %v800, 64
    %v803 = vpop.permute.xlu0 %802
    %v804 = vsel %vm94, %v803, 0
    %806 = vmatprep.subr.mxu0 0.0
    %807 = vmatpush1.msra.mxu0 0.0
    %808 = vmatprep.subr.mxu0 0.0
    %809 = vmatpush1.msra.mxu0 0.0
    %810 = vmatprep.subr.mxu0 0.0
    %811 = vmatpush1.msra.mxu0 0.0
    %812 = vmatprep.subr.mxu0 0.0
    %813 = vmatpush1.msra.mxu0 0.0
    %814 = vmatprep.subr.mxu0 0.0
    %815 = vmatpush1.msra.mxu0 0.0
    %816 = vmatprep.subr.mxu0 0.0
    %817 = vmatpush1.msra.mxu0 0.0
    %818 = vmatprep.subr.mxu0 0.0
    %819 = vmatpush1.msra.mxu0 0.0
    %820 = vmatprep.subr.mxu0 0.0
    %821 = vmatpush1.msra.mxu0 0.0
    %822 = vmatprep.subr.mxu0 %v61
    %823 = vmatpush1.msra.mxu0 %v60
    %824 = vmatprep.subr.mxu0 %v59
    %825 = vmatpush1.msra.mxu0 %v58
    %826 = vmatprep.subr.mxu0 %v57
    %827 = vmatpush1.msra.mxu0 %v56
    %828 = vmatprep.subr.mxu0 %v55
    %829 = vmatpush1.msra.mxu0 %v54
    %830 = vmatprep.subr.mxu0 %v53
    %831 = vmatpush1.msra.mxu0 %v52
    %832 = vmatprep.subr.mxu0 %v51
    %833 = vmatpush1.msra.mxu0 %v50
    %834 = vmatprep.subr.mxu0 %v49
    %835 = vmatpush1.msra.mxu0 %v48
    %836 = vmatprep.subr.mxu0 %v47
    %837 = vmatpush1.msra.mxu0 %v46
    %838 = vmatprep.subr.mxu0 0.0
    %839 = vmatpush2.msra.mxu0 0.0
    %840 = vmatprep.subr.mxu0 0.0
    %841 = vmatpush2.msra.mxu0 0.0
    %842 = vmatprep.subr.mxu0 0.0
    %843 = vmatpush2.msra.mxu0 0.0
    %844 = vmatprep.subr.mxu0 0.0
    %845 = vmatpush2.msra.mxu0 0.0
    %846 = vmatprep.subr.mxu0 0.0
    %847 = vmatpush2.msra.mxu0 0.0
    %848 = vmatprep.subr.mxu0 0.0
    %849 = vmatpush2.msra.mxu0 0.0
    %850 = vmatprep.subr.mxu0 0.0
    %851 = vmatpush2.msra.mxu0 0.0
    %852 = vmatprep.subr.mxu0 0.0
    %853 = vmatpush2.msra.mxu0 0.0
    %854 = vmatprep.subr.mxu0 0.0
    %855 = vmatpush2.msra.mxu0 0.0
    %856 = vmatprep.subr.mxu0 0.0
    %857 = vmatpush2.msra.mxu0 0.0
    %858 = vmatprep.subr.mxu0 0.0
    %859 = vmatpush2.msra.mxu0 0.0
    %860 = vmatprep.subr.mxu0 0.0
    %861 = vmatpush2.msra.mxu0 0.0
    %862 = vmatprep.subr.mxu0 0.0
    %863 = vmatpush2.msra.mxu0 0.0
    %864 = vmatprep.subr.mxu0 0.0
    %865 = vmatpush2.msra.mxu0 0.0
    %866 = vmatprep.subr.mxu0 0.0
    %867 = vmatpush2.msra.mxu0 0.0
    %868 = vmatprep.subr.mxu0 0.0
    %869 = vmatpush2.msra.mxu0 0.0
    %870 = vmatprep.mubr.f32.mxu0 0.0
    %871 = vmatmul.mubr.f32.gmra.mxu0 %v804
    %v872 = vpop.f32.mrf.mxu0
    %v873 = vadd.f32 %v701, %v872
    %v874 = vpop.f32.mrf.mxu0
    %v875 = vadd.f32 %v702, %v874
    %876 = vdwg.mxu0
    %v877 = vxor.u32 %v873, 2147483648
    %v878 = vxor.u32 %v875, 2147483648
    %v879 = vmul.f32 %v877, 1.442695
    %v880 = vpow.pop %v879
    %v881 = vmul.f32 %v878, 1.442695
    %v882 = vpow.pop %v881
    %v883 = vadd.f32 %v880, 1.0
    %v884 = vadd.f32 %v882, 1.0
    %v885 = vrcp.pop %v883
    %v886 = vmul.f32 1.0, %v885
    %v887 = vrcp.pop %v884
    %v888 = vmul.f32 1.0, %v887
    %v889 = vtanh.pop %v875
    %v890 = vmul.f32 %v886, %v798
    %v891 = vmul.f32 %v886, %v889
    %893 = vrot.lane.b32.xlu0 %v891, 64
    %v894 = vpop.permute.xlu0 %893
    %v896 = vadd.f32 %v890, %v894
    %v897 = vtanh.pop %v896
    %v898 = vmul.f32 %v888, %v897
    %v899 = vld [vmem:[%s2] sm:$0xff]
    %v900 = vld [vmem:[%s2 + $0x8] sm:$0xff]
    %v901 = vld [vmem:[%s2 + $0x10] sm:$0xff]
    %v902 = vld [vmem:[%s2 + $0x18] sm:$0xff]
    %v903 = vld [vmem:[%s3] sm:$0x1]
    %v905 = vlaneseq
    %v906 = vshrl.u32 %v905, 7
    %v907 = vsub.s32 0, %v906
    %v908 = vrot.slane %v903, %v907
    %911 = vrot.lane.b32.xlu0 %v898, 32
    %v912 = vpop.permute.xlu0 %911
    %v913 = vsel %vm88, %v912, 0
    %915 = vmatprep.subr.mxu0 0.0
    %916 = vmatpush1.msra.mxu0 0.0
    %917 = vmatprep.subr.mxu0 0.0
    %918 = vmatpush1.msra.mxu0 0.0
    %919 = vmatprep.subr.mxu0 0.0
    %920 = vmatpush1.msra.mxu0 0.0
    %921 = vmatprep.subr.mxu0 0.0
    %922 = vmatpush1.msra.mxu0 0.0
    %923 = vmatprep.subr.mxu0 0.0
    %924 = vmatpush1.msra.mxu0 0.0
    %925 = vmatprep.subr.mxu0 0.0
    %926 = vmatpush1.msra.mxu0 0.0
    %927 = vmatprep.subr.mxu0 0.0
    %928 = vmatpush1.msra.mxu0 0.0
    %929 = vmatprep.subr.mxu0 0.0
    %930 = vmatpush1.msra.mxu0 0.0
    %931 = vmatprep.subr.mxu0 0.0
    %932 = vmatpush1.msra.mxu0 0.0
    %933 = vmatprep.subr.mxu0 0.0
    %934 = vmatpush1.msra.mxu0 0.0
    %935 = vmatprep.subr.mxu0 0.0
    %936 = vmatpush1.msra.mxu0 0.0
    %937 = vmatprep.subr.mxu0 0.0
    %938 = vmatpush1.msra.mxu0 0.0
    %939 = vmatprep.subr.mxu0 0.0
    %940 = vmatpush1.msra.mxu0 %v902
    %941 = vmatprep.subr.mxu0 0.0
    %942 = vmatpush1.msra.mxu0 %v901
    %943 = vmatprep.subr.mxu0 0.0
    %944 = vmatpush1.msra.mxu0 %v900
    %945 = vmatprep.subr.mxu0 0.0
    %946 = vmatpush1.msra.mxu0 %v899
    %947 = vmatprep.subr.mxu0 0.0
    %948 = vmatpush2.msra.mxu0 0.0
    %949 = vmatprep.subr.mxu0 0.0
    %950 = vmatpush2.msra.mxu0 0.0
    %951 = vmatprep.subr.mxu0 0.0
    %952 = vmatpush2.msra.mxu0 0.0
    %953 = vmatprep.subr.mxu0 0.0
    %954 = vmatpush2.msra.mxu0 0.0
    %955 = vmatprep.subr.mxu0 0.0
    %956 = vmatpush2.msra.mxu0 0.0
    %957 = vmatprep.subr.mxu0 0.0
    %958 = vmatpush2.msra.mxu0 0.0
    %959 = vmatprep.subr.mxu0 0.0
    %960 = vmatpush2.msra.mxu0 0.0
    %961 = vmatprep.subr.mxu0 0.0
    %962 = vmatpush2.msra.mxu0 0.0
    %963 = vmatprep.subr.mxu0 0.0
    %964 = vmatpush2.msra.mxu0 0.0
    %965 = vmatprep.subr.mxu0 0.0
    %966 = vmatpush2.msra.mxu0 0.0
    %967 = vmatprep.subr.mxu0 0.0
    %968 = vmatpush2.msra.mxu0 0.0
    %969 = vmatprep.subr.mxu0 0.0
    %970 = vmatpush2.msra.mxu0 0.0
    %971 = vmatprep.subr.mxu0 0.0
    %972 = vmatpush2.msra.mxu0 0.0
    %973 = vmatprep.subr.mxu0 0.0
    %974 = vmatpush2.msra.mxu0 0.0
    %975 = vmatprep.subr.mxu0 0.0
    %976 = vmatpush2.msra.mxu0 0.0
    %977 = vmatprep.subr.mxu0 0.0
    %978 = vmatpush2.msra.mxu0 0.0
    %979 = vmatprep.mubr.f32.mxu0 0.0
    %980 = vmatmul.mubr.f32.gmra.mxu0 %v913
    %v981 = vpop.f32.mrf.mxu0
    %v982 = vadd.f32 %v908, %v981
    %v983 = vpop.f32.mrf.mxu0
    %984 = vdwg.mxu0
    %vm985 = vcmask 39936
    %v986 = vsel %vm985, %v982, -inf
    %v987 = vrot.slane %v986, 4
    %v988 = vmax.f32 %v986, %v987
    %v989 = vrot.slane %v988, 2
    %v990 = vmax.f32 %v988, %v989
    %v991 = vrot.slane %v990, 1
    %v992 = vmax.f32 %v990, %v991
    %v993 = vsub.f32 %v982, %v992
    %v994 = vmul.f32 %v993, 1.442695
    %v995 = vpow.pop %v994
    %v996 = vsel %vm985, %v995, 0.0
    %v997 = vrot.slane %v996, 4
    %v998 = vadd.f32 %v996, %v997
    %v999 = vrot.slane %v998, 2
    %v1000 = vadd.f32 %v998, %v999
    %v1001 = vrot.slane %v1000, 1
    %v1002 = vadd.f32 %v1000, %v1001
    %v1003 = vrcp.pop %v1002
    %v1004 = vmul.f32 %v995, %v1003
    %1005 = vst.msk [vmem:[#allocation7] sm:$0xff] %vm985, %v1004
    // Predicated region
    $region26: #{tpu_custom_call.1} parent=1 // pred_check
      _
    $region27: #{tpu_custom_call.1} parent=1 // pred_check_branch
      %1007 = sbr.rel (0) target = $region29
    $region28: #{tpu_custom_call.1} parent=1 // pred_region
      %s1009 = ssub.s32 128, 128
      %1010 = vsyncadd [#allocation4], %s1009
      %s1012 = sshll.u32 [#allocation7], 4
      %s1013 = int_to_ptr.vmem [resolvable:$true] %s1012
      %1015 = dma.vmem_to_hbm [thread:$0]  %s1013, 128, %s4, [#allocation4]
    $region29: #{tpu_custom_call.1} parent=1 // pred_fallthru
      _
    // Predicated region
    $region30: #{tpu_custom_call.1} parent=1 // pred_check
      _
    $region31: #{tpu_custom_call.1} parent=1 // pred_check_branch
      %1017 = sbr.rel (0) target = $region33
    $region32: #{tpu_custom_call.1} parent=1 // pred_region
      %1018 = dma.done [#allocation4], 128
    $region33: #{tpu_custom_call.1} parent=1 // pred_fallthru
      _
    %1019 = vsyncpa [#allocation3], 1
    %1020 = vsyncpa [#allocation6], 1
    %1021 = vsyncpa [#allocation4], 1

</llo_original>
